<compile_context>
chip_gen: v5e
topology: v5e:2x2
jax: 0.10.0
libtpu: 0.0.40
codegen_flags: <defaults>
</compile_context>

<pallas_src>
import functools

import jax
import jax.numpy as jnp
from jax.experimental import pallas as pl
from jax.experimental.pallas import tpu as pltpu

_LANES = 128
_MAX_TILE_ROWS = 512  # 512*128*4 B = 256 KiB per operand tile -> tiny VMEM footprint


def _add_kernel(x_ref, p_ref, o_ref):
    """Inference path: pure elementwise add."""
    o_ref[...] = x_ref[...] + p_ref[...]


def _add_dropout_kernel(keep_threshold, inv_keep_prob, x_ref, p_ref, bits_ref, o_ref):
    """Training path: add + inverted dropout via integer-threshold compare."""
    out = x_ref[...] + p_ref[...]
    keep = bits_ref[...] >= jnp.uint32(keep_threshold)          # P(keep) = 1 - p
    o_ref[...] = jnp.where(keep, out * jnp.asarray(inv_keep_prob, out.dtype),
                           jnp.zeros_like(out))


def _lane_dense(flat, pad_elems):
    if pad_elems:
        flat = jnp.pad(flat, (0, pad_elems))
    return flat.reshape(-1, _LANES)


def position_embs(x, pos_embedding, *, dropout_rate=0.1, training=False, rng_key=None):
    """x, pos_embedding: (2, c_dim, 1, num_patches + 1), same dtype/shape."""
    assert x.shape == pos_embedding.shape, (x.shape, pos_embedding.shape)
    orig_shape = x.shape
    total = x.size

    # ---- lane-dense reshape: (..., W=16) -> (rows, 128), pad if needed ----
    pad_elems = (-total) % _LANES
    rows = (total + pad_elems) // _LANES
    if rows > _MAX_TILE_ROWS:
        tile_rows = _MAX_TILE_ROWS
        extra_rows = (-rows) % tile_rows
        pad_elems += extra_rows * _LANES
        rows += extra_rows
    else:
        tile_rows = rows  # single full-array block at small shapes

    x2 = _lane_dense(x.reshape(-1), pad_elems)
    p2 = _lane_dense(pos_embedding.reshape(-1), pad_elems)
    grid = (rows // tile_rows,)
    blk = pl.BlockSpec((tile_rows, _LANES), lambda i: (i, 0))
    cparams = pltpu.CompilerParams(dimension_semantics=("parallel",))
    out_shape = jax.ShapeDtypeStruct((rows, _LANES), x.dtype)

    use_dropout = training and dropout_rate > 0.0

    if not use_dropout:
        # Inference: no seed / mask argument, no scalar prefetch.
        out2 = pl.pallas_call(
            _add_kernel,
            out_shape=out_shape,
            grid_spec=pl.GridSpec(grid=grid, in_specs=[blk, blk], out_specs=blk),
            compiler_params=cparams,
        )(x2, p2)
    else:
        if rng_key is None:
            rng_key = jax.random.PRNGKey(0)
        # Uniform uint32 bits generated outside the kernel (portable; no
        # pltpu.prng_* dependency), consumed lane-dense inside the kernel.
        bits = jax.random.bits(rng_key, (rows, _LANES), dtype=jnp.uint32)
        # keep iff bits >= p * 2^32  ->  P(keep) = 1 - p
        keep_threshold = min(int(float(dropout_rate) * (1 << 32)), (1 << 32) - 1)
        inv_keep_prob = 1.0 / (1.0 - float(dropout_rate))
        kernel = functools.partial(_add_dropout_kernel, keep_threshold, inv_keep_prob)
        out2 = pl.pallas_call(
            kernel,
            out_shape=out_shape,
            grid_spec=pl.GridSpec(grid=grid, in_specs=[blk, blk, blk], out_specs=blk),
            compiler_params=cparams,
        )(x2, p2, bits)

    out_flat = out2.reshape(-1)
    if pad_elems:
        out_flat = out_flat[:total]
    return out_flat.reshape(orig_shape)


if __name__ == "__main__":
    # Shapes implied by the module: leading dim fixed at 2, c_dim=32,
    # num_patches=15 -> W = num_patches + 1 = 16.
    c_dim = 32
    num_patches = 15
    dropout_rate = 0.1

    key = jax.random.PRNGKey(0)
    kx, kp, kd = jax.random.split(key, 3)

    x = jax.random.normal(kx, (2, c_dim, 1, num_patches + 1), dtype=jnp.float32)
    # Deterministic stand-in for torch.randn(2, c_dim, 1, num_patches + 1)
    pos_embedding = jax.random.normal(kp, (2, c_dim, 1, num_patches + 1),
                                      dtype=jnp.float32)

    # ---- inference mode (dropout is identity, matches module.eval()) ----
    out = jax.block_until_ready(
        position_embs(x, pos_embedding, dropout_rate=dropout_rate, training=False)
    )
    ref = x + pos_embedding
    assert out.shape == x.shape and out.dtype == x.dtype
    assert jnp.allclose(out, ref, atol=1e-6, rtol=1e-6), "mismatch vs reference add"

    # ---- training mode (add + inverted dropout) ----
    out_tr = jax.block_until_ready(
        position_embs(x, pos_embedding, dropout_rate=dropout_rate,
                      training=True, rng_key=kd)
    )
    assert out_tr.shape == x.shape
    # Every element is either 0 (dropped) or (x + pos) / (1 - p) (kept).
    scaled_ref = ref / (1.0 - dropout_rate)
    structural_ok = jnp.where(out_tr == 0.0, True,
                              jnp.isclose(out_tr, scaled_ref, atol=1e-5, rtol=1e-5))
    assert bool(jnp.all(structural_ok)), "dropout output not {0, (x+pos)/(1-p)}"
    drop_frac = float(jnp.mean((out_tr == 0.0).astype(jnp.float32)))
    assert 0.0 < drop_frac < 0.3, f"implausible drop fraction {drop_frac}"

    print("KERNEL_OK")
</pallas_src>

<mosaic_0001>
module attributes {stable_mosaic.version = 11 : i64} {
  func.func @_add_kernel(%arg0: i32, %arg1: memref<8x128xf32, #tpu.memory_space<vmem>>, %arg2: memref<8x128xf32, #tpu.memory_space<vmem>>, %arg3: memref<8x128xf32, #tpu.memory_space<vmem>>) attributes {dimension_semantics = [#tpu.dimension_semantics<parallel>], iteration_bounds = array<i64: 1>, scalar_prefetch = 0 : i64, scratch_operands = 0 : i64, tpu.core_type = #tpu.core_type<tc>, window_params = [{transform_indices = @transform_0, window_bounds = array<i64: 8, 128>}, {transform_indices = @transform_1, window_bounds = array<i64: 8, 128>}, {transform_indices = @transform_2, window_bounds = array<i64: 8, 128>}]} {
    %c0 = arith.constant 0 : index
    %c0_0 = arith.constant 0 : index
    %0 = vector.load %arg1[%c0, %c0_0] : memref<8x128xf32, #tpu.memory_space<vmem>>, vector<8x128xf32>
    %c0_1 = arith.constant 0 : index
    %c0_2 = arith.constant 0 : index
    %1 = vector.load %arg2[%c0_1, %c0_2] : memref<8x128xf32, #tpu.memory_space<vmem>>, vector<8x128xf32>
    %2 = arith.addf %0, %1 : vector<8x128xf32>
    %c0_3 = arith.constant 0 : index
    %c0_4 = arith.constant 0 : index
    %3 = vector.load %arg3[%c0_3, %c0_4] : memref<8x128xf32, #tpu.memory_space<vmem>>, vector<8x128xf32>
    tpu.vector_store %arg3[%c0_3, %c0_4], %2 {strides = array<i32>} : memref<8x128xf32, #tpu.memory_space<vmem>>, vector<8x128xf32>,
    return
  }
  func.func @transform_0(%arg0: i32) -> (i32, i32) {
    %c0_i32 = arith.constant 0 : i32
    %c0_i32_0 = arith.constant 0 : i32
    return %arg0, %c0_i32 : i32, i32
  }
  func.func @transform_1(%arg0: i32) -> (i32, i32) {
    %c0_i32 = arith.constant 0 : i32
    %c0_i32_0 = arith.constant 0 : i32
    return %arg0, %c0_i32 : i32, i32
  }
  func.func @transform_2(%arg0: i32) -> (i32, i32) {
    %c0_i32 = arith.constant 0 : i32
    %c0_i32_0 = arith.constant 0 : i32
    return %arg0, %c0_i32 : i32, i32
  }
}

</mosaic_0001>

<llo_original>
// kernel: tpu_custom_call.1
$region0: #{tpu_custom_call.1}
  #allocation0 [shape = 'u32[]', space=smem, size = 0x4, offset = 0x4, fixed_abs, tag = 'smem constant byte address 0x4 - core index']
  #allocation1 [shape = 'u32[72,128]{1,0:T(1,128)}', space=vmem, size = 0x9000, scoped, tag = 'internal scratch']
  %s0 = inlined_call_operand.hbm [shape: f32[8,128], index: 0, kind: input, shape index: {}]
  %s1 = inlined_call_operand.hbm [shape: f32[8,128], index: 1, kind: input, shape index: {}]
  %s2 = inlined_call_operand.hbm [shape: f32[8,128], index: 2, kind: output, shape index: {}]
  %s3 = sld [smem:[#allocation0]]
  $region26: #{tpu_custom_call.1} parent=0
    _
  %s5 = ssub.s32 1, %s3
  %s6 = scalar_select 0, %s5, %s3
  $region1: #{tpu_custom_call.1} parent=0
    #allocation2 [shape = 'u8[4096]{0}', space=vmem, size = 0x1000, scoped, tag = 'input window, operand 0, single buffered']
    #allocation3 [shape = 's32[1]{0}', space=sflag, size = 0x4, scoped, tag = 'scoped memory for tpu_custom_call.1']
    #allocation4 [shape = 's32[1]{0}', space=sflag, size = 0x4, scoped, tag = 'scoped memory for tpu_custom_call.1']
    #allocation5 [shape = 'u8[4096]{0}', space=vmem, size = 0x1000, scoped, tag = 'input window, operand 1, single buffered']
    #allocation6 [shape = 's32[1]{0}', space=sflag, size = 0x4, scoped, tag = 'scoped memory for tpu_custom_call.1']
    #allocation7 [shape = 'u8[4096]{0}', space=vmem, size = 0x1000, scoped, tag = 'output window, operand 0, single buffered']
    %7 = vsyncpa [#allocation3], 0
    %8 = vsyncpa [#allocation6], 0
    %9 = vsyncpa [#allocation4], 0
    // Predicated region
    $region2: #{tpu_custom_call.1} parent=1 // pred_check
      _
    $region3: #{tpu_custom_call.1} parent=1 // pred_check_branch
      %11 = sbr.rel (0) target = $region5
    $region4: #{tpu_custom_call.1} parent=1 // pred_region
      %13 = vsyncadd [#allocation3], 0
      %s15 = sshll.u32 %s0, 4
      %s16 = int_to_ptr.hbm [resolvable:$true] %s15
      %s17 = sshll.u32 [#allocation2], 4
      %s18 = int_to_ptr.vmem [resolvable:$true] %s17
      %20 = dma.hbm_to_vmem [thread:$0]  %s16, 128, %s18, [#allocation3]
    $region5: #{tpu_custom_call.1} parent=1 // pred_fallthru
      _
    // Predicated region
    $region6: #{tpu_custom_call.1} parent=1 // pred_check
      _
    $region7: #{tpu_custom_call.1} parent=1 // pred_check_branch
      %22 = sbr.rel (0) target = $region9
    $region8: #{tpu_custom_call.1} parent=1 // pred_region
      %24 = vsyncadd [#allocation6], 0
      %s26 = sshll.u32 %s1, 4
      %s27 = int_to_ptr.hbm [resolvable:$true] %s26
      %s28 = sshll.u32 [#allocation5], 4
      %s29 = int_to_ptr.vmem [resolvable:$true] %s28
      %31 = dma.hbm_to_vmem [thread:$0]  %s27, 128, %s29, [#allocation6]
    $region9: #{tpu_custom_call.1} parent=1 // pred_fallthru
      _
    // Predicated region
    $region10: #{tpu_custom_call.1} parent=1 // pred_check
      _
    $region11: #{tpu_custom_call.1} parent=1 // pred_check_branch
      %33 = sbr.rel (0) target = $region13
    $region12: #{tpu_custom_call.1} parent=1 // pred_region
      %35 = dma.done [#allocation3], 128
    $region13: #{tpu_custom_call.1} parent=1 // pred_fallthru
      _
    // Predicated region
    $region14: #{tpu_custom_call.1} parent=1 // pred_check
      _
    $region15: #{tpu_custom_call.1} parent=1 // pred_check_branch
      %37 = sbr.rel (0) target = $region17
    $region16: #{tpu_custom_call.1} parent=1 // pred_region
      %39 = dma.done [#allocation6], 128
    $region17: #{tpu_custom_call.1} parent=1 // pred_fallthru
      _
    %v40 = vld [vmem:[#allocation2] sm:$0xff]
    %v41 = vld [vmem:[#allocation5] sm:$0xff]
    %v42 = vadd.f32 %v40, %v41
    %43 = vst [vmem:[#allocation7] sm:$0xff] %v42
    // Predicated region
    $region18: #{tpu_custom_call.1} parent=1 // pred_check
      _
    $region19: #{tpu_custom_call.1} parent=1 // pred_check_branch
      %45 = sbr.rel (0) target = $region21
    $region20: #{tpu_custom_call.1} parent=1 // pred_region
      %47 = vsyncadd [#allocation4], 0
      %s49 = sshll.u32 [#allocation7], 4
      %s50 = int_to_ptr.vmem [resolvable:$true] %s49
      %s51 = sshll.u32 %s2, 4
      %s52 = int_to_ptr.hbm [resolvable:$true] %s51
      %54 = dma.vmem_to_hbm [thread:$0]  %s50, 128, %s52, [#allocation4]
    $region21: #{tpu_custom_call.1} parent=1 // pred_fallthru
      _
    // Predicated region
    $region22: #{tpu_custom_call.1} parent=1 // pred_check
      _
    $region23: #{tpu_custom_call.1} parent=1 // pred_check_branch
      %56 = sbr.rel (0) target = $region25
    $region24: #{tpu_custom_call.1} parent=1 // pred_region
      %58 = dma.done [#allocation4], 128
    $region25: #{tpu_custom_call.1} parent=1 // pred_fallthru
      _
    %59 = vsyncpa [#allocation3], 1
    %60 = vsyncpa [#allocation6], 1
    %61 = vsyncpa [#allocation4], 1

</llo_original>
